<compile_context>
chip_gen: v6e
topology: v6e:2x2x1
jax: 0.10.0
libtpu: 0.0.40
codegen_flags: <defaults>
</compile_context>

<pallas_src>
import functools

import jax
import jax.numpy as jnp
from jax import lax
from jax.experimental import pallas as pl
from jax.experimental.pallas import tpu as pltpu

_LANES = 128
_SUB_ROWS = 256  # inner sub-block rows: bounds [S, C] / [S, 128-lane] vreg temps


def _round_up(x, m):
    return (x + m - 1) // m * m


def _choose_tiling(n_samples, n_classes, logits_itemsize):
    # Double-buffered VMEM bytes per tile row:
    #   logits block row: n_classes * itemsize
    #   labels block row: (T, 1) int32 pads to 128 lanes -> 512 B (budgeted, not relayouted)
    bytes_per_row = 2 * (n_classes * logits_itemsize + _LANES * 4)
    budget = 16 * 1024 * 1024  # data budget; safe on every generation's scoped VMEM
    tile_n = max(8, budget // bytes_per_row)
    tile_n = min(tile_n, 8192)                      # per-step overhead amortized well before this
    tile_n = min(tile_n, _round_up(n_samples, 8))
    if tile_n >= _SUB_ROWS:
        sub_n = _SUB_ROWS
        tile_n = (tile_n // sub_n) * sub_n
    else:
        tile_n = max(8, (tile_n // 8) * 8)
        sub_n = tile_n
    return tile_n, sub_n


def _ece_partial_kernel(labels_ref, logits_ref, out_ref, *,
                        n_bins, n_samples, n_classes, tile_n, sub_n):
    """Writes this tile's per-bin partial sums of (conf - correct)."""
    i = pl.program_id(0)
    n_sub = tile_n // sub_n
    row_base = i * tile_n

    # Loop-invariant broadcasts hoisted out of the sub-block loop (JAX won't CSE them).
    ones_row = jnp.ones((1, sub_n), jnp.float32)
    col_ids = lax.broadcasted_iota(jnp.int32, (sub_n, n_classes), 1)
    bin_iota = lax.broadcasted_iota(jnp.int32, (sub_n, n_bins), 1)
    sub_rows = lax.broadcasted_iota(jnp.int32, (sub_n, 1), 0)

    def body(s, acc):
        r0 = s * sub_n
        if not isinstance(r0, int):
            r0 = pl.multiple_of(r0, sub_n)
        x = logits_ref[pl.ds(r0, sub_n), :].astype(jnp.float32)          # [S, C]
        labels = labels_ref[pl.ds(r0, sub_n), :]                          # [S, 1]

        # confidence = max_c softmax(x)_c = 1 / sum_c exp(x_c - max_c x)
        row_max = jnp.max(x, axis=-1, keepdims=True)                      # [S, 1]
        denom = jnp.sum(jnp.exp(x - row_max), axis=-1, keepdims=True)     # [S, 1]
        conf = pl.reciprocal(denom, approx=False)                         # [S, 1]

        # prediction = first argmax over classes (torch.max semantics)
        pred = jnp.min(jnp.where(x == row_max, col_ids, n_classes),
                       axis=-1, keepdims=True)                            # [S, 1]
        correct = (pred == labels).astype(jnp.float32)                    # [S, 1]

        # Rows past n_samples (partial last block) hold undefined data:
        # use a select (not a multiply) so NaN/Inf can never propagate.
        row_ids = row_base + r0 + sub_rows                                # [S, 1]
        diff = jnp.where(row_ids < n_samples, conf - correct, 0.0)        # [S, 1]

        # equal-width (lower, upper] bins -> one compare + one select
        bin_id = jnp.clip(jnp.ceil(conf * n_bins).astype(jnp.int32) - 1,
                          0, n_bins - 1)                                  # [S, 1]
        contrib = jnp.where(bin_id == bin_iota, diff, 0.0)                # [S, B]

        # per-bin reduce over the sub-block rides the otherwise-idle MXU
        return acc + jnp.dot(ones_row, contrib,
                             preferred_element_type=jnp.float32)          # [1, B]

    acc0 = jnp.zeros((1, n_bins), jnp.float32)
    if n_sub == 1:
        acc = body(0, acc0)
    else:
        acc = lax.fori_loop(0, n_sub, body, acc0, unroll=(n_sub <= 8))
    out_ref[...] = acc.reshape(1, 1, n_bins)


def ece_loss(labels, logits, n_bins=15, percent=True):
    """labels: [N] int, logits: [N, C] float. Returns scalar ECE (optionally *100)."""
    n_samples, n_classes = logits.shape
    itemsize = jnp.dtype(logits.dtype).itemsize
    tile_n, sub_n = _choose_tiling(n_samples, n_classes, itemsize)
    num_tiles = pl.cdiv(n_samples, tile_n)

    # No wrapper-side padding (no extra HBM pass); partial last block is masked in-kernel.
    labels2d = labels.astype(jnp.int32).reshape(n_samples, 1)

    kernel = functools.partial(
        _ece_partial_kernel, n_bins=n_bins, n_samples=n_samples,
        n_classes=n_classes, tile_n=tile_n, sub_n=sub_n)

    block_bytes = 2 * tile_n * (n_classes * itemsize + _LANES * 4)
    vmem_limit = max(32 * 1024 * 1024, int(block_bytes * 1.25) + (2 << 20))

    partials = pl.pallas_call(
        kernel,
        out_shape=jax.ShapeDtypeStruct((num_tiles, 1, n_bins), jnp.float32),
        grid_spec=pltpu.PrefetchScalarGridSpec(
            num_scalar_prefetch=0,
            grid=(num_tiles,),
            in_specs=[
                pl.BlockSpec((tile_n, 1), lambda i: (i, 0)),            # labels
                pl.BlockSpec((tile_n, n_classes), lambda i: (i, 0)),    # logits (wire dtype)
            ],
            out_specs=pl.BlockSpec((1, 1, n_bins), lambda i: (i, 0, 0)),
        ),
        compiler_params=pltpu.CompilerParams(
            dimension_semantics=("parallel",),
            vmem_limit_bytes=vmem_limit),
    )(labels2d, logits)

    # Tiny wrapper-side reduce over num_tiles * n_bins floats:
    # ece = sum_b |sum_{i in bin b}(conf_i - correct_i)| / N
    bin_sums = jnp.sum(partials, axis=(0, 1))                            # [n_bins]
    ece = jnp.sum(jnp.abs(bin_sums)) * jnp.float32(1.0 / n_samples)
    return 100.0 * ece if percent else ece


if __name__ == "__main__":
    key = jax.random.PRNGKey(0)
    k_logits, k_labels = jax.random.split(key)

    N, C = 128, 16  # samples, classes
    logits = jax.random.normal(k_logits, (N, C), dtype=jnp.float32) * 2.0
    labels = jax.random.randint(k_labels, (N,), 0, C, dtype=jnp.int32)

    out = ece_loss(labels, logits, n_bins=15, percent=True)
    jax.block_until_ready(out)
    print("KERNEL_OK")
</pallas_src>

<mosaic_0001>
module attributes {stable_mosaic.version = 11 : i64} {
  func.func @_ece_partial_kernel(%arg0: i32, %arg1: memref<128x1xi32, #tpu.memory_space<vmem>>, %arg2: memref<128x16xf32, #tpu.memory_space<vmem>>, %arg3: memref<1x1x15xf32, #tpu.memory_space<vmem>>) attributes {dimension_semantics = [#tpu.dimension_semantics<parallel>], iteration_bounds = array<i64: 1>, scalar_prefetch = 0 : i64, scratch_operands = 0 : i64, tpu.core_type = #tpu.core_type<tc>, window_params = [{transform_indices = @transform_0, window_bounds = array<i64: 128, 1>}, {transform_indices = @transform_1, window_bounds = array<i64: 128, 16>}, {transform_indices = @transform_2, window_bounds = array<i64: 1, 1, 15>}]} {
    %c128_i32 = arith.constant 128 : i32
    %0 = arith.muli %arg0, %c128_i32 : i32
    %cst = arith.constant 1.000000e+00 : f32
    %1 = vector.broadcast %cst : f32 to vector<1x128xf32>
    %2 = tpu.iota {dimensions = array<i32: 1>} : vector<128x16xi32>
    %3 = tpu.iota {dimensions = array<i32: 1>} : vector<128x15xi32>
    %4 = tpu.iota {dimensions = array<i32: 0>} : vector<128x1xi32>
    %cst_0 = arith.constant 0.000000e+00 : f32
    %5 = vector.broadcast %cst_0 : f32 to vector<1x15xf32>
    %c0 = arith.constant 0 : index
    %c0_1 = arith.constant 0 : index
    %6 = vector.load %arg2[%c0, %c0_1] : memref<128x16xf32, #tpu.memory_space<vmem>>, vector<128x16xf32>
    %c0_2 = arith.constant 0 : index
    %c0_3 = arith.constant 0 : index
    %7 = vector.load %arg1[%c0_2, %c0_3] : memref<128x1xi32, #tpu.memory_space<vmem>>, vector<128x1xi32>
    %cst_4 = arith.constant dense<0xFF800000> : vector<128xf32>
    %8 = vector.multi_reduction <maximumf>, %6, %cst_4 [1] : vector<128x16xf32> to vector<128xf32>
    %9 = vector.shape_cast %8 : vector<128xf32> to vector<128x1xf32>
    %10 = vector.broadcast %9 : vector<128x1xf32> to vector<128x16xf32>
    %11 = arith.subf %6, %10 : vector<128x16xf32>
    %12 = math.exp %11 : vector<128x16xf32>
    %cst_5 = arith.constant dense<0.000000e+00> : vector<128xf32>
    %13 = vector.multi_reduction <add>, %12, %cst_5 [1] : vector<128x16xf32> to vector<128xf32>
    %14 = vector.shape_cast %13 : vector<128xf32> to vector<128x1xf32>
    %15 = tpu.reciprocal %14 : vector<128x1xf32> -> vector<128x1xf32>
    %16 = vector.broadcast %9 : vector<128x1xf32> to vector<128x16xf32>
    %17 = arith.cmpf oeq, %6, %16 : vector<128x16xf32>
    %c16_i32 = arith.constant 16 : i32
    %18 = vector.broadcast %c16_i32 : i32 to vector<128x16xi32>
    %19 = arith.select %17, %2, %18 : vector<128x16xi1>, vector<128x16xi32>
    %cst_6 = arith.constant dense<2147483647> : vector<128xi32>
    %20 = vector.multi_reduction <minsi>, %19, %cst_6 [1] : vector<128x16xi32> to vector<128xi32>
    %21 = vector.shape_cast %20 : vector<128xi32> to vector<128x1xi32>
    %22 = arith.cmpi eq, %21, %7 : vector<128x1xi32>
    %23 = arith.extui %22 : vector<128x1xi1> to vector<128x1xi32>
    %24 = arith.sitofp %23 : vector<128x1xi32> to vector<128x1xf32>
    %c0_i32 = arith.constant 0 : i32
    %25 = arith.addi %0, %c0_i32 : i32
    %26 = vector.broadcast %25 : i32 to vector<128x1xi32>
    %27 = arith.addi %26, %4 : vector<128x1xi32>
    %c128_i32_7 = arith.constant 128 : i32
    %28 = vector.broadcast %c128_i32_7 : i32 to vector<128x1xi32>
    %29 = arith.cmpi slt, %27, %28 : vector<128x1xi32>
    %30 = arith.subf %15, %24 : vector<128x1xf32>
    %cst_8 = arith.constant 0.000000e+00 : f32
    %31 = vector.broadcast %cst_8 : f32 to vector<128x1xf32>
    %32 = arith.select %29, %30, %31 : vector<128x1xi1>, vector<128x1xf32>
    %cst_9 = arith.constant 1.500000e+01 : f32
    %33 = vector.broadcast %cst_9 : f32 to vector<128x1xf32>
    %34 = arith.mulf %15, %33 : vector<128x1xf32>
    %35 = math.ceil %34 : vector<128x1xf32>
    %36 = arith.fptosi %35 : vector<128x1xf32> to vector<128x1xi32>
    %c1_i32 = arith.constant 1 : i32
    %37 = vector.broadcast %c1_i32 : i32 to vector<128x1xi32>
    %38 = arith.subi %36, %37 : vector<128x1xi32>
    %c0_i32_10 = arith.constant 0 : i32
    %c14_i32 = arith.constant 14 : i32
    %39 = vector.broadcast %c0_i32_10 : i32 to vector<128x1xi32>
    %40 = arith.maxsi %39, %38 : vector<128x1xi32>
    %41 = vector.broadcast %c14_i32 : i32 to vector<128x1xi32>
    %42 = arith.minsi %41, %40 : vector<128x1xi32>
    %43 = vector.broadcast %42 : vector<128x1xi32> to vector<128x15xi32>
    %44 = arith.cmpi eq, %43, %3 : vector<128x15xi32>
    %cst_11 = arith.constant 0.000000e+00 : f32
    %45 = vector.shape_cast %32 : vector<128x1xf32> to vector<128x1xf32>
    %46 = vector.broadcast %45 : vector<128x1xf32> to vector<128x15xf32>
    %47 = vector.broadcast %cst_11 : f32 to vector<128x15xf32>
    %48 = arith.select %44, %46, %47 : vector<128x15xi1>, vector<128x15xf32>
    %cst_12 = arith.constant dense<0.000000e+00> : vector<1x15xf32>
    %49 = tpu.matmul %1, %48, %cst_12 {dimension_numbers = #tpu.dot_dimension_numbers<[1], [0], [0], [1], [0, 0, 1, 1], [], []>} : vector<1x128xf32>, vector<128x15xf32>, vector<1x15xf32> -> vector<1x15xf32>
    %50 = arith.addf %5, %49 : vector<1x15xf32>
    %51 = vector.shape_cast %50 : vector<1x15xf32> to vector<1x1x15xf32>
    %c0_13 = arith.constant 0 : index
    %c0_14 = arith.constant 0 : index
    %c0_15 = arith.constant 0 : index
    %52 = vector.load %arg3[%c0_13, %c0_14, %c0_15] : memref<1x1x15xf32, #tpu.memory_space<vmem>>, vector<1x1x15xf32>
    tpu.vector_store %arg3[%c0_13, %c0_14, %c0_15], %51 {strides = array<i32>} : memref<1x1x15xf32, #tpu.memory_space<vmem>>, vector<1x1x15xf32>,
    return
  }
  func.func @transform_0(%arg0: i32) -> (i32, i32) {
    %c0_i32 = arith.constant 0 : i32
    %c0_i32_0 = arith.constant 0 : i32
    return %arg0, %c0_i32 : i32, i32
  }
  func.func @transform_1(%arg0: i32) -> (i32, i32) {
    %c0_i32 = arith.constant 0 : i32
    %c0_i32_0 = arith.constant 0 : i32
    return %arg0, %c0_i32 : i32, i32
  }
  func.func @transform_2(%arg0: i32) -> (i32, i32, i32) {
    %c0_i32 = arith.constant 0 : i32
    %c0_i32_0 = arith.constant 0 : i32
    %c0_i32_1 = arith.constant 0 : i32
    return %arg0, %c0_i32, %c0_i32_0 : i32, i32, i32
  }
}

</mosaic_0001>

<llo_original>
// kernel: tpu_custom_call.1
$region0: #{tpu_custom_call.1}
  #allocation0 [shape = 'u32[]', space=smem, size = 0x4, offset = 0x4, fixed_abs, tag = 'smem constant byte address 0x4 - core index']
  #allocation1 [shape = 'u32[144,128]{1,0:T(1,128)}', space=vmem, size = 0x12000, scoped, tag = 'internal scratch']
  %s0 = inlined_call_operand.vmem [shape: s32[128,1], index: 0, kind: input, shape index: {}]
  %s1 = inlined_call_operand.vmem [shape: f32[128,16], index: 1, kind: input, shape index: {}]
  %s2 = inlined_call_operand.hbm [shape: f32[1,1,15], index: 2, kind: output, shape index: {}]
  %s3 = sld [smem:[#allocation0]]
  $region18: #{tpu_custom_call.1} parent=0
    _
  %s5 = ssub.s32 1, %s3
  %s6 = scalar_select 0, %s5, %s3
  $region1: #{tpu_custom_call.1} parent=0
    #allocation2 [shape = 'u8[512]{0}', space=vmem, size = 0x400, scoped, tag = 'output window, operand 0, single buffered']
    #allocation3 [shape = 's32[1]{0}', space=sflag, size = 0x4, scoped, tag = 'scoped memory for tpu_custom_call.1']
    %7 = vsyncpa [#allocation3], 0
    // Predicated region
    $region2: #{tpu_custom_call.1} parent=1 // pred_check
      _
    $region3: #{tpu_custom_call.1} parent=1 // pred_check_branch
      %9 = sbr.rel (0) target = $region5
    $region4: #{tpu_custom_call.1} parent=1 // pred_region
      _
    $region5: #{tpu_custom_call.1} parent=1 // pred_fallthru
      _
    // Predicated region
    $region6: #{tpu_custom_call.1} parent=1 // pred_check
      _
    $region7: #{tpu_custom_call.1} parent=1 // pred_check_branch
      %11 = sbr.rel (0) target = $region9
    $region8: #{tpu_custom_call.1} parent=1 // pred_region
      _
    $region9: #{tpu_custom_call.1} parent=1 // pred_fallthru
      _
    %s12 = smul.u32 0, 128
    %v13 = vlaneseq
    %v14 = vand.u32 %v13, 127
    %v15 = vlaneseq
    %v16 = vshrl.u32 %v15, 7
    %v17 = vadd.s32 %v16, 8
    %v18 = vadd.s32 %v16, 16
    %v19 = vadd.s32 %v16, 24
    %v20 = vadd.s32 %v16, 32
    %v21 = vadd.s32 %v16, 40
    %v22 = vadd.s32 %v16, 48
    %v23 = vadd.s32 %v16, 56
    %v24 = vadd.s32 %v16, 64
    %v25 = vadd.s32 %v16, 72
    %v26 = vadd.s32 %v16, 80
    %v27 = vadd.s32 %v16, 88
    %v28 = vadd.s32 %v16, 96
    %v29 = vadd.s32 %v16, 104
    %v30 = vadd.s32 %v16, 112
    %v31 = vadd.s32 %v16, 120
    %v32 = vld [vmem:[%s1] sm:$0xff]
    %v33 = vld [vmem:[%s1 + $0x8] sm:$0xff]
    %v34 = vld [vmem:[%s1 + $0x10] sm:$0xff]
    %v35 = vld [vmem:[%s1 + $0x18] sm:$0xff]
    %v36 = vld [vmem:[%s1 + $0x20] sm:$0xff]
    %v37 = vld [vmem:[%s1 + $0x28] sm:$0xff]
    %v38 = vld [vmem:[%s1 + $0x30] sm:$0xff]
    %v39 = vld [vmem:[%s1 + $0x38] sm:$0xff]
    %v40 = vld [vmem:[%s1 + $0x40] sm:$0xff]
    %v41 = vld [vmem:[%s1 + $0x48] sm:$0xff]
    %v42 = vld [vmem:[%s1 + $0x50] sm:$0xff]
    %v43 = vld [vmem:[%s1 + $0x58] sm:$0xff]
    %v44 = vld [vmem:[%s1 + $0x60] sm:$0xff]
    %v45 = vld [vmem:[%s1 + $0x68] sm:$0xff]
    %v46 = vld [vmem:[%s1 + $0x70] sm:$0xff]
    %v47 = vld [vmem:[%s1 + $0x78] sm:$0xff]
    %v48 = vld [vmem:[%s0] sm:$0xff]
    %v49 = vld [vmem:[%s0 + $0x8] sm:$0xff]
    %v50 = vld [vmem:[%s0 + $0x10] sm:$0xff]
    %v51 = vld [vmem:[%s0 + $0x18] sm:$0xff]
    %v52 = vld [vmem:[%s0 + $0x20] sm:$0xff]
    %v53 = vld [vmem:[%s0 + $0x28] sm:$0xff]
    %v54 = vld [vmem:[%s0 + $0x30] sm:$0xff]
    %v55 = vld [vmem:[%s0 + $0x38] sm:$0xff]
    %v56 = vld [vmem:[%s0 + $0x40] sm:$0xff]
    %v57 = vld [vmem:[%s0 + $0x48] sm:$0xff]
    %v58 = vld [vmem:[%s0 + $0x50] sm:$0xff]
    %v59 = vld [vmem:[%s0 + $0x58] sm:$0xff]
    %v60 = vld [vmem:[%s0 + $0x60] sm:$0xff]
    %v61 = vld [vmem:[%s0 + $0x68] sm:$0xff]
    %v62 = vld [vmem:[%s0 + $0x70] sm:$0xff]
    %v63 = vld [vmem:[%s0 + $0x78] sm:$0xff]
    %vm64 = vcmask 130048
    %v65 = vsel %vm64, %v32, -inf
    %66 = vmax.xlane.f32.xlu0 %v65
    %v67 = vpop.xlane.xlu0 %66
    %v68 = vsel %vm64, %v33, -inf
    %69 = vmax.xlane.f32.xlu0 %v68
    %v70 = vpop.xlane.xlu0 %69
    %v71 = vsel %vm64, %v34, -inf
    %72 = vmax.xlane.f32.xlu0 %v71
    %v73 = vpop.xlane.xlu0 %72
    %v74 = vsel %vm64, %v35, -inf
    %75 = vmax.xlane.f32.xlu0 %v74
    %v76 = vpop.xlane.xlu0 %75
    %v77 = vsel %vm64, %v36, -inf
    %78 = vmax.xlane.f32.xlu0 %v77
    %v79 = vpop.xlane.xlu0 %78
    %v80 = vsel %vm64, %v37, -inf
    %81 = vmax.xlane.f32.xlu0 %v80
    %v82 = vpop.xlane.xlu0 %81
    %v83 = vsel %vm64, %v38, -inf
    %84 = vmax.xlane.f32.xlu0 %v83
    %v85 = vpop.xlane.xlu0 %84
    %v86 = vsel %vm64, %v39, -inf
    %87 = vmax.xlane.f32.xlu0 %v86
    %v88 = vpop.xlane.xlu0 %87
    %v89 = vsel %vm64, %v40, -inf
    %90 = vmax.xlane.f32.xlu0 %v89
    %v91 = vpop.xlane.xlu0 %90
    %v92 = vsel %vm64, %v41, -inf
    %93 = vmax.xlane.f32.xlu0 %v92
    %v94 = vpop.xlane.xlu0 %93
    %v95 = vsel %vm64, %v42, -inf
    %96 = vmax.xlane.f32.xlu0 %v95
    %v97 = vpop.xlane.xlu0 %96
    %v98 = vsel %vm64, %v43, -inf
    %99 = vmax.xlane.f32.xlu0 %v98
    %v100 = vpop.xlane.xlu0 %99
    %v101 = vsel %vm64, %v44, -inf
    %102 = vmax.xlane.f32.xlu0 %v101
    %v103 = vpop.xlane.xlu0 %102
    %v104 = vsel %vm64, %v45, -inf
    %105 = vmax.xlane.f32.xlu0 %v104
    %v106 = vpop.xlane.xlu0 %105
    %v107 = vsel %vm64, %v46, -inf
    %108 = vmax.xlane.f32.xlu0 %v107
    %v109 = vpop.xlane.xlu0 %108
    %v110 = vsel %vm64, %v47, -inf
    %111 = vmax.xlane.f32.xlu0 %v110
    %v112 = vpop.xlane.xlu0 %111
    %v113 = vsub.f32 %v32, %v67
    %v114 = vsub.f32 %v33, %v70
    %v115 = vsub.f32 %v34, %v73
    %v116 = vsub.f32 %v35, %v76
    %v117 = vsub.f32 %v36, %v79
    %v118 = vsub.f32 %v37, %v82
    %v119 = vsub.f32 %v38, %v85
    %v120 = vsub.f32 %v39, %v88
    %v121 = vsub.f32 %v40, %v91
    %v122 = vsub.f32 %v41, %v94
    %v123 = vsub.f32 %v42, %v97
    %v124 = vsub.f32 %v43, %v100
    %v125 = vsub.f32 %v44, %v103
    %v126 = vsub.f32 %v45, %v106
    %v127 = vsub.f32 %v46, %v109
    %v128 = vsub.f32 %v47, %v112
    %v129 = vmul.f32 %v113, 1.442695
    %v130 = vpow.pop %v129
    %v131 = vmul.f32 %v114, 1.442695
    %v132 = vpow.pop %v131
    %v133 = vmul.f32 %v115, 1.442695
    %v134 = vpow.pop %v133
    %v135 = vmul.f32 %v116, 1.442695
    %v136 = vpow.pop %v135
    %v137 = vmul.f32 %v117, 1.442695
    %v138 = vpow.pop %v137
    %v139 = vmul.f32 %v118, 1.442695
    %v140 = vpow.pop %v139
    %v141 = vmul.f32 %v119, 1.442695
    %v142 = vpow.pop %v141
    %v143 = vmul.f32 %v120, 1.442695
    %v144 = vpow.pop %v143
    %v145 = vmul.f32 %v121, 1.442695
    %v146 = vpow.pop %v145
    %v147 = vmul.f32 %v122, 1.442695
    %v148 = vpow.pop %v147
    %v149 = vmul.f32 %v123, 1.442695
    %v150 = vpow.pop %v149
    %v151 = vmul.f32 %v124, 1.442695
    %v152 = vpow.pop %v151
    %v153 = vmul.f32 %v125, 1.442695
    %v154 = vpow.pop %v153
    %v155 = vmul.f32 %v126, 1.442695
    %v156 = vpow.pop %v155
    %v157 = vmul.f32 %v127, 1.442695
    %v158 = vpow.pop %v157
    %v159 = vmul.f32 %v128, 1.442695
    %v160 = vpow.pop %v159
    %v161 = vsel %vm64, %v130, 0.0
    %162 = vadd.xlane.f32.xlu0 %v161
    %v163 = vpop.xlane.xlu0 %162
    %v164 = vsel %vm64, %v132, 0.0
    %165 = vadd.xlane.f32.xlu0 %v164
    %v166 = vpop.xlane.xlu0 %165
    %v167 = vsel %vm64, %v134, 0.0
    %168 = vadd.xlane.f32.xlu0 %v167
    %v169 = vpop.xlane.xlu0 %168
    %v170 = vsel %vm64, %v136, 0.0
    %171 = vadd.xlane.f32.xlu0 %v170
    %v172 = vpop.xlane.xlu0 %171
    %v173 = vsel %vm64, %v138, 0.0
    %174 = vadd.xlane.f32.xlu0 %v173
    %v175 = vpop.xlane.xlu0 %174
    %v176 = vsel %vm64, %v140, 0.0
    %177 = vadd.xlane.f32.xlu0 %v176
    %v178 = vpop.xlane.xlu0 %177
    %v179 = vsel %vm64, %v142, 0.0
    %180 = vadd.xlane.f32.xlu0 %v179
    %v181 = vpop.xlane.xlu0 %180
    %v182 = vsel %vm64, %v144, 0.0
    %183 = vadd.xlane.f32.xlu0 %v182
    %v184 = vpop.xlane.xlu0 %183
    %v185 = vsel %vm64, %v146, 0.0
    %186 = vadd.xlane.f32.xlu0 %v185
    %v187 = vpop.xlane.xlu0 %186
    %v188 = vsel %vm64, %v148, 0.0
    %189 = vadd.xlane.f32.xlu0 %v188
    %v190 = vpop.xlane.xlu0 %189
    %v191 = vsel %vm64, %v150, 0.0
    %192 = vadd.xlane.f32.xlu0 %v191
    %v193 = vpop.xlane.xlu0 %192
    %v194 = vsel %vm64, %v152, 0.0
    %195 = vadd.xlane.f32.xlu0 %v194
    %v196 = vpop.xlane.xlu0 %195
    %v197 = vsel %vm64, %v154, 0.0
    %198 = vadd.xlane.f32.xlu0 %v197
    %v199 = vpop.xlane.xlu0 %198
    %v200 = vsel %vm64, %v156, 0.0
    %201 = vadd.xlane.f32.xlu0 %v200
    %v202 = vpop.xlane.xlu0 %201
    %v203 = vsel %vm64, %v158, 0.0
    %204 = vadd.xlane.f32.xlu0 %v203
    %v205 = vpop.xlane.xlu0 %204
    %v206 = vsel %vm64, %v160, 0.0
    %207 = vadd.xlane.f32.xlu0 %v206
    %v208 = vpop.xlane.xlu0 %207
    %v209 = vrcp.pop %v163
    %v210 = vrcp.pop %v166
    %v211 = vrcp.pop %v169
    %v212 = vrcp.pop %v172
    %v213 = vrcp.pop %v175
    %v214 = vrcp.pop %v178
    %v215 = vrcp.pop %v181
    %v216 = vrcp.pop %v184
    %v217 = vrcp.pop %v187
    %v218 = vrcp.pop %v190
    %v219 = vrcp.pop %v193
    %v220 = vrcp.pop %v196
    %v221 = vrcp.pop %v199
    %v222 = vrcp.pop %v202
    %v223 = vrcp.pop %v205
    %v224 = vrcp.pop %v208
    %vm225 = vcmp.eq.f32.partialorder %v32, %v67
    %vm226 = vcmp.eq.f32.partialorder %v33, %v70
    %vm227 = vcmp.eq.f32.partialorder %v34, %v73
    %vm228 = vcmp.eq.f32.partialorder %v35, %v76
    %vm229 = vcmp.eq.f32.partialorder %v36, %v79
    %vm230 = vcmp.eq.f32.partialorder %v37, %v82
    %vm231 = vcmp.eq.f32.partialorder %v38, %v85
    %vm232 = vcmp.eq.f32.partialorder %v39, %v88
    %vm233 = vcmp.eq.f32.partialorder %v40, %v91
    %vm234 = vcmp.eq.f32.partialorder %v41, %v94
    %vm235 = vcmp.eq.f32.partialorder %v42, %v97
    %vm236 = vcmp.eq.f32.partialorder %v43, %v100
    %vm237 = vcmp.eq.f32.partialorder %v44, %v103
    %vm238 = vcmp.eq.f32.partialorder %v45, %v106
    %vm239 = vcmp.eq.f32.partialorder %v46, %v109
    %vm240 = vcmp.eq.f32.partialorder %v47, %v112
    %v241 = vsel %vm225, %v14, 16
    %v242 = vsel %vm226, %v14, 16
    %v243 = vsel %vm227, %v14, 16
    %v244 = vsel %vm228, %v14, 16
    %v245 = vsel %vm229, %v14, 16
    %v246 = vsel %vm230, %v14, 16
    %v247 = vsel %vm231, %v14, 16
    %v248 = vsel %vm232, %v14, 16
    %v249 = vsel %vm233, %v14, 16
    %v250 = vsel %vm234, %v14, 16
    %v251 = vsel %vm235, %v14, 16
    %v252 = vsel %vm236, %v14, 16
    %v253 = vsel %vm237, %v14, 16
    %v254 = vsel %vm238, %v14, 16
    %v255 = vsel %vm239, %v14, 16
    %v256 = vsel %vm240, %v14, 16
    %v257 = vsel %vm64, %v241, 2147483647
    %v258 = vand.u32 %v257, 65535
    %v259 = vshra.s32 %v257, 16
    %v260 = vcvt.s32.f32 %v258
    %v261 = vcvt.s32.f32 %v259
    %262 = vmin.xlane.f32.xlu0 %v261
    %v263 = vpop.xlane.xlu0 %262
    %vm264 = vcmp.eq.f32.partialorder %v261, %v263
    %v265 = vsel %vm264, %v260, inf
    %266 = vmin.xlane.f32.xlu0 %v265
    %v267 = vpop.xlane.xlu0 %266
    %v268 = vcvt.f32.s32 %v267
    %v269 = vcvt.f32.s32 %v263
    %v270 = vshll.u32 %v269, 16
    %v271 = vadd.s32 %v270, %v268
    %v272 = vsel %vm64, %v242, 2147483647
    %v273 = vand.u32 %v272, 65535
    %v274 = vshra.s32 %v272, 16
    %v275 = vcvt.s32.f32 %v273
    %v276 = vcvt.s32.f32 %v274
    %277 = vmin.xlane.f32.xlu0 %v276
    %v278 = vpop.xlane.xlu0 %277
    %vm279 = vcmp.eq.f32.partialorder %v276, %v278
    %v280 = vsel %vm279, %v275, inf
    %281 = vmin.xlane.f32.xlu0 %v280
    %v282 = vpop.xlane.xlu0 %281
    %v283 = vcvt.f32.s32 %v282
    %v284 = vcvt.f32.s32 %v278
    %v285 = vshll.u32 %v284, 16
    %v286 = vadd.s32 %v285, %v283
    %v287 = vsel %vm64, %v243, 2147483647
    %v288 = vand.u32 %v287, 65535
    %v289 = vshra.s32 %v287, 16
    %v290 = vcvt.s32.f32 %v288
    %v291 = vcvt.s32.f32 %v289
    %292 = vmin.xlane.f32.xlu0 %v291
    %v293 = vpop.xlane.xlu0 %292
    %vm294 = vcmp.eq.f32.partialorder %v291, %v293
    %v295 = vsel %vm294, %v290, inf
    %296 = vmin.xlane.f32.xlu0 %v295
    %v297 = vpop.xlane.xlu0 %296
    %v298 = vcvt.f32.s32 %v297
    %v299 = vcvt.f32.s32 %v293
    %v300 = vshll.u32 %v299, 16
    %v301 = vadd.s32 %v300, %v298
    %v302 = vsel %vm64, %v244, 2147483647
    %v303 = vand.u32 %v302, 65535
    %v304 = vshra.s32 %v302, 16
    %v305 = vcvt.s32.f32 %v303
    %v306 = vcvt.s32.f32 %v304
    %307 = vmin.xlane.f32.xlu0 %v306
    %v308 = vpop.xlane.xlu0 %307
    %vm309 = vcmp.eq.f32.partialorder %v306, %v308
    %v310 = vsel %vm309, %v305, inf
    %311 = vmin.xlane.f32.xlu0 %v310
    %v312 = vpop.xlane.xlu0 %311
    %v313 = vcvt.f32.s32 %v312
    %v314 = vcvt.f32.s32 %v308
    %v315 = vshll.u32 %v314, 16
    %v316 = vadd.s32 %v315, %v313
    %v317 = vsel %vm64, %v245, 2147483647
    %v318 = vand.u32 %v317, 65535
    %v319 = vshra.s32 %v317, 16
    %v320 = vcvt.s32.f32 %v318
    %v321 = vcvt.s32.f32 %v319
    %322 = vmin.xlane.f32.xlu0 %v321
    %v323 = vpop.xlane.xlu0 %322
    %vm324 = vcmp.eq.f32.partialorder %v321, %v323
    %v325 = vsel %vm324, %v320, inf
    %326 = vmin.xlane.f32.xlu0 %v325
    %v327 = vpop.xlane.xlu0 %326
    %v328 = vcvt.f32.s32 %v327
    %v329 = vcvt.f32.s32 %v323
    %v330 = vshll.u32 %v329, 16
    %v331 = vadd.s32 %v330, %v328
    %v332 = vsel %vm64, %v246, 2147483647
    %v333 = vand.u32 %v332, 65535
    %v334 = vshra.s32 %v332, 16
    %v335 = vcvt.s32.f32 %v333
    %v336 = vcvt.s32.f32 %v334
    %337 = vmin.xlane.f32.xlu0 %v336
    %v338 = vpop.xlane.xlu0 %337
    %vm339 = vcmp.eq.f32.partialorder %v336, %v338
    %v340 = vsel %vm339, %v335, inf
    %341 = vmin.xlane.f32.xlu0 %v340
    %v342 = vpop.xlane.xlu0 %341
    %v343 = vcvt.f32.s32 %v342
    %v344 = vcvt.f32.s32 %v338
    %v345 = vshll.u32 %v344, 16
    %v346 = vadd.s32 %v345, %v343
    %v347 = vsel %vm64, %v247, 2147483647
    %v348 = vand.u32 %v347, 65535
    %v349 = vshra.s32 %v347, 16
    %v350 = vcvt.s32.f32 %v348
    %v351 = vcvt.s32.f32 %v349
    %352 = vmin.xlane.f32.xlu0 %v351
    %v353 = vpop.xlane.xlu0 %352
    %vm354 = vcmp.eq.f32.partialorder %v351, %v353
    %v355 = vsel %vm354, %v350, inf
    %356 = vmin.xlane.f32.xlu0 %v355
    %v357 = vpop.xlane.xlu0 %356
    %v358 = vcvt.f32.s32 %v357
    %v359 = vcvt.f32.s32 %v353
    %v360 = vshll.u32 %v359, 16
    %v361 = vadd.s32 %v360, %v358
    %v362 = vsel %vm64, %v248, 2147483647
    %v363 = vand.u32 %v362, 65535
    %v364 = vshra.s32 %v362, 16
    %v365 = vcvt.s32.f32 %v363
    %v366 = vcvt.s32.f32 %v364
    %367 = vmin.xlane.f32.xlu0 %v366
    %v368 = vpop.xlane.xlu0 %367
    %vm369 = vcmp.eq.f32.partialorder %v366, %v368
    %v370 = vsel %vm369, %v365, inf
    %371 = vmin.xlane.f32.xlu0 %v370
    %v372 = vpop.xlane.xlu0 %371
    %v373 = vcvt.f32.s32 %v372
    %v374 = vcvt.f32.s32 %v368
    %v375 = vshll.u32 %v374, 16
    %v376 = vadd.s32 %v375, %v373
    %v377 = vsel %vm64, %v249, 2147483647
    %v378 = vand.u32 %v377, 65535
    %v379 = vshra.s32 %v377, 16
    %v380 = vcvt.s32.f32 %v378
    %v381 = vcvt.s32.f32 %v379
    %382 = vmin.xlane.f32.xlu0 %v381
    %v383 = vpop.xlane.xlu0 %382
    %vm384 = vcmp.eq.f32.partialorder %v381, %v383
    %v385 = vsel %vm384, %v380, inf
    %386 = vmin.xlane.f32.xlu0 %v385
    %v387 = vpop.xlane.xlu0 %386
    %v388 = vcvt.f32.s32 %v387
    %v389 = vcvt.f32.s32 %v383
    %v390 = vshll.u32 %v389, 16
    %v391 = vadd.s32 %v390, %v388
    %v392 = vsel %vm64, %v250, 2147483647
    %v393 = vand.u32 %v392, 65535
    %v394 = vshra.s32 %v392, 16
    %v395 = vcvt.s32.f32 %v393
    %v396 = vcvt.s32.f32 %v394
    %397 = vmin.xlane.f32.xlu0 %v396
    %v398 = vpop.xlane.xlu0 %397
    %vm399 = vcmp.eq.f32.partialorder %v396, %v398
    %v400 = vsel %vm399, %v395, inf
    %401 = vmin.xlane.f32.xlu0 %v400
    %v402 = vpop.xlane.xlu0 %401
    %v403 = vcvt.f32.s32 %v402
    %v404 = vcvt.f32.s32 %v398
    %v405 = vshll.u32 %v404, 16
    %v406 = vadd.s32 %v405, %v403
    %v407 = vsel %vm64, %v251, 2147483647
    %v408 = vand.u32 %v407, 65535
    %v409 = vshra.s32 %v407, 16
    %v410 = vcvt.s32.f32 %v408
    %v411 = vcvt.s32.f32 %v409
    %412 = vmin.xlane.f32.xlu0 %v411
    %v413 = vpop.xlane.xlu0 %412
    %vm414 = vcmp.eq.f32.partialorder %v411, %v413
    %v415 = vsel %vm414, %v410, inf
    %416 = vmin.xlane.f32.xlu0 %v415
    %v417 = vpop.xlane.xlu0 %416
    %v418 = vcvt.f32.s32 %v417
    %v419 = vcvt.f32.s32 %v413
    %v420 = vshll.u32 %v419, 16
    %v421 = vadd.s32 %v420, %v418
    %v422 = vsel %vm64, %v252, 2147483647
    %v423 = vand.u32 %v422, 65535
    %v424 = vshra.s32 %v422, 16
    %v425 = vcvt.s32.f32 %v423
    %v426 = vcvt.s32.f32 %v424
    %427 = vmin.xlane.f32.xlu0 %v426
    %v428 = vpop.xlane.xlu0 %427
    %vm429 = vcmp.eq.f32.partialorder %v426, %v428
    %v430 = vsel %vm429, %v425, inf
    %431 = vmin.xlane.f32.xlu0 %v430
    %v432 = vpop.xlane.xlu0 %431
    %v433 = vcvt.f32.s32 %v432
    %v434 = vcvt.f32.s32 %v428
    %v435 = vshll.u32 %v434, 16
    %v436 = vadd.s32 %v435, %v433
    %v437 = vsel %vm64, %v253, 2147483647
    %v438 = vand.u32 %v437, 65535
    %v439 = vshra.s32 %v437, 16
    %v440 = vcvt.s32.f32 %v438
    %v441 = vcvt.s32.f32 %v439
    %442 = vmin.xlane.f32.xlu0 %v441
    %v443 = vpop.xlane.xlu0 %442
    %vm444 = vcmp.eq.f32.partialorder %v441, %v443
    %v445 = vsel %vm444, %v440, inf
    %446 = vmin.xlane.f32.xlu0 %v445
    %v447 = vpop.xlane.xlu0 %446
    %v448 = vcvt.f32.s32 %v447
    %v449 = vcvt.f32.s32 %v443
    %v450 = vshll.u32 %v449, 16
    %v451 = vadd.s32 %v450, %v448
    %v452 = vsel %vm64, %v254, 2147483647
    %v453 = vand.u32 %v452, 65535
    %v454 = vshra.s32 %v452, 16
    %v455 = vcvt.s32.f32 %v453
    %v456 = vcvt.s32.f32 %v454
    %457 = vmin.xlane.f32.xlu0 %v456
    %v458 = vpop.xlane.xlu0 %457
    %vm459 = vcmp.eq.f32.partialorder %v456, %v458
    %v460 = vsel %vm459, %v455, inf
    %461 = vmin.xlane.f32.xlu0 %v460
    %v462 = vpop.xlane.xlu0 %461
    %v463 = vcvt.f32.s32 %v462
    %v464 = vcvt.f32.s32 %v458
    %v465 = vshll.u32 %v464, 16
    %v466 = vadd.s32 %v465, %v463
    %v467 = vsel %vm64, %v255, 2147483647
    %v468 = vand.u32 %v467, 65535
    %v469 = vshra.s32 %v467, 16
    %v470 = vcvt.s32.f32 %v468
    %v471 = vcvt.s32.f32 %v469
    %472 = vmin.xlane.f32.xlu0 %v471
    %v473 = vpop.xlane.xlu0 %472
    %vm474 = vcmp.eq.f32.partialorder %v471, %v473
    %v475 = vsel %vm474, %v470, inf
    %476 = vmin.xlane.f32.xlu0 %v475
    %v477 = vpop.xlane.xlu0 %476
    %v478 = vcvt.f32.s32 %v477
    %v479 = vcvt.f32.s32 %v473
    %v480 = vshll.u32 %v479, 16
    %v481 = vadd.s32 %v480, %v478
    %v482 = vsel %vm64, %v256, 2147483647
    %v483 = vand.u32 %v482, 65535
    %v484 = vshra.s32 %v482, 16
    %v485 = vcvt.s32.f32 %v483
    %v486 = vcvt.s32.f32 %v484
    %487 = vmin.xlane.f32.xlu0 %v486
    %v488 = vpop.xlane.xlu0 %487
    %vm489 = vcmp.eq.f32.partialorder %v486, %v488
    %v490 = vsel %vm489, %v485, inf
    %491 = vmin.xlane.f32.xlu0 %v490
    %v492 = vpop.xlane.xlu0 %491
    %v493 = vcvt.f32.s32 %v492
    %v494 = vcvt.f32.s32 %v488
    %v495 = vshll.u32 %v494, 16
    %v496 = vadd.s32 %v495, %v493
    %vm497 = vcmp.eq.s32.totalorder %v271, %v48
    %vm498 = vcmp.eq.s32.totalorder %v286, %v49
    %vm499 = vcmp.eq.s32.totalorder %v301, %v50
    %vm500 = vcmp.eq.s32.totalorder %v316, %v51
    %vm501 = vcmp.eq.s32.totalorder %v331, %v52
    %vm502 = vcmp.eq.s32.totalorder %v346, %v53
    %vm503 = vcmp.eq.s32.totalorder %v361, %v54
    %vm504 = vcmp.eq.s32.totalorder %v376, %v55
    %vm505 = vcmp.eq.s32.totalorder %v391, %v56
    %vm506 = vcmp.eq.s32.totalorder %v406, %v57
    %vm507 = vcmp.eq.s32.totalorder %v421, %v58
    %vm508 = vcmp.eq.s32.totalorder %v436, %v59
    %vm509 = vcmp.eq.s32.totalorder %v451, %v60
    %vm510 = vcmp.eq.s32.totalorder %v466, %v61
    %vm511 = vcmp.eq.s32.totalorder %v481, %v62
    %vm512 = vcmp.eq.s32.totalorder %v496, %v63
    %v513 = vsel %vm497, 1, 0
    %v514 = vsel %vm498, 1, 0
    %v515 = vsel %vm499, 1, 0
    %v516 = vsel %vm500, 1, 0
    %v517 = vsel %vm501, 1, 0
    %v518 = vsel %vm502, 1, 0
    %v519 = vsel %vm503, 1, 0
    %v520 = vsel %vm504, 1, 0
    %v521 = vsel %vm505, 1, 0
    %v522 = vsel %vm506, 1, 0
    %v523 = vsel %vm507, 1, 0
    %v524 = vsel %vm508, 1, 0
    %v525 = vsel %vm509, 1, 0
    %v526 = vsel %vm510, 1, 0
    %v527 = vsel %vm511, 1, 0
    %v528 = vsel %vm512, 1, 0
    %v529 = vcvt.s32.f32 %v513
    %v530 = vcvt.s32.f32 %v514
    %v531 = vcvt.s32.f32 %v515
    %v532 = vcvt.s32.f32 %v516
    %v533 = vcvt.s32.f32 %v517
    %v534 = vcvt.s32.f32 %v518
    %v535 = vcvt.s32.f32 %v519
    %v536 = vcvt.s32.f32 %v520
    %v537 = vcvt.s32.f32 %v521
    %v538 = vcvt.s32.f32 %v522
    %v539 = vcvt.s32.f32 %v523
    %v540 = vcvt.s32.f32 %v524
    %v541 = vcvt.s32.f32 %v525
    %v542 = vcvt.s32.f32 %v526
    %v543 = vcvt.s32.f32 %v527
    %v544 = vcvt.s32.f32 %v528
    %v545 = vstv %s12
    %v546 = vadd.s32 %v545, %v16
    %v547 = vadd.s32 %v545, %v17
    %v548 = vadd.s32 %v545, %v18
    %v549 = vadd.s32 %v545, %v19
    %v550 = vadd.s32 %v545, %v20
    %v551 = vadd.s32 %v545, %v21
    %v552 = vadd.s32 %v545, %v22
    %v553 = vadd.s32 %v545, %v23
    %v554 = vadd.s32 %v545, %v24
    %v555 = vadd.s32 %v545, %v25
    %v556 = vadd.s32 %v545, %v26
    %v557 = vadd.s32 %v545, %v27
    %v558 = vadd.s32 %v545, %v28
    %v559 = vadd.s32 %v545, %v29
    %v560 = vadd.s32 %v545, %v30
    %v561 = vadd.s32 %v545, %v31
    %vm562 = vcmp.lt.s32.totalorder %v546, 128
    %vm563 = vcmp.lt.s32.totalorder %v547, 128
    %vm564 = vcmp.lt.s32.totalorder %v548, 128
    %vm565 = vcmp.lt.s32.totalorder %v549, 128
    %vm566 = vcmp.lt.s32.totalorder %v550, 128
    %vm567 = vcmp.lt.s32.totalorder %v551, 128
    %vm568 = vcmp.lt.s32.totalorder %v552, 128
    %vm569 = vcmp.lt.s32.totalorder %v553, 128
    %vm570 = vcmp.lt.s32.totalorder %v554, 128
    %vm571 = vcmp.lt.s32.totalorder %v555, 128
    %vm572 = vcmp.lt.s32.totalorder %v556, 128
    %vm573 = vcmp.lt.s32.totalorder %v557, 128
    %vm574 = vcmp.lt.s32.totalorder %v558, 128
    %vm575 = vcmp.lt.s32.totalorder %v559, 128
    %vm576 = vcmp.lt.s32.totalorder %v560, 128
    %vm577 = vcmp.lt.s32.totalorder %v561, 128
    %v578 = vsub.f32 %v209, %v529
    %v579 = vsub.f32 %v210, %v530
    %v580 = vsub.f32 %v211, %v531
    %v581 = vsub.f32 %v212, %v532
    %v582 = vsub.f32 %v213, %v533
    %v583 = vsub.f32 %v214, %v534
    %v584 = vsub.f32 %v215, %v535
    %v585 = vsub.f32 %v216, %v536
    %v586 = vsub.f32 %v217, %v537
    %v587 = vsub.f32 %v218, %v538
    %v588 = vsub.f32 %v219, %v539
    %v589 = vsub.f32 %v220, %v540
    %v590 = vsub.f32 %v221, %v541
    %v591 = vsub.f32 %v222, %v542
    %v592 = vsub.f32 %v223, %v543
    %v593 = vsub.f32 %v224, %v544
    %v594 = vsel %vm562, %v578, 0.0
    %v595 = vsel %vm563, %v579, 0.0
    %v596 = vsel %vm564, %v580, 0.0
    %v597 = vsel %vm565, %v581, 0.0
    %v598 = vsel %vm566, %v582, 0.0
    %v599 = vsel %vm567, %v583, 0.0
    %v600 = vsel %vm568, %v584, 0.0
    %v601 = vsel %vm569, %v585, 0.0
    %v602 = vsel %vm570, %v586, 0.0
    %v603 = vsel %vm571, %v587, 0.0
    %v604 = vsel %vm572, %v588, 0.0
    %v605 = vsel %vm573, %v589, 0.0
    %v606 = vsel %vm574, %v590, 0.0
    %v607 = vsel %vm575, %v591, 0.0
    %v608 = vsel %vm576, %v592, 0.0
    %v609 = vsel %vm577, %v593, 0.0
    %v610 = vmul.f32 %v209, 15.0
    %v611 = vmul.f32 %v210, 15.0
    %v612 = vmul.f32 %v211, 15.0
    %v613 = vmul.f32 %v212, 15.0
    %v614 = vmul.f32 %v213, 15.0
    %v615 = vmul.f32 %v214, 15.0
    %v616 = vmul.f32 %v215, 15.0
    %v617 = vmul.f32 %v216, 15.0
    %v618 = vmul.f32 %v217, 15.0
    %v619 = vmul.f32 %v218, 15.0
    %v620 = vmul.f32 %v219, 15.0
    %v621 = vmul.f32 %v220, 15.0
    %v622 = vmul.f32 %v221, 15.0
    %v623 = vmul.f32 %v222, 15.0
    %v624 = vmul.f32 %v223, 15.0
    %v625 = vmul.f32 %v224, 15.0
    %v626 = vceil.f32 %v610
    %v627 = vceil.f32 %v611
    %v628 = vceil.f32 %v612
    %v629 = vceil.f32 %v613
    %v630 = vceil.f32 %v614
    %v631 = vceil.f32 %v615
    %v632 = vceil.f32 %v616
    %v633 = vceil.f32 %v617
    %v634 = vceil.f32 %v618
    %v635 = vceil.f32 %v619
    %v636 = vceil.f32 %v620
    %v637 = vceil.f32 %v621
    %v638 = vceil.f32 %v622
    %v639 = vceil.f32 %v623
    %v640 = vceil.f32 %v624
    %v641 = vceil.f32 %v625
    %v642 = vcvt.f32.s32.to.zero.pseudo %v626
    %v643 = vcvt.f32.s32.to.zero.pseudo %v627
    %v644 = vcvt.f32.s32.to.zero.pseudo %v628
    %v645 = vcvt.f32.s32.to.zero.pseudo %v629
    %v646 = vcvt.f32.s32.to.zero.pseudo %v630
    %v647 = vcvt.f32.s32.to.zero.pseudo %v631
    %v648 = vcvt.f32.s32.to.zero.pseudo %v632
    %v649 = vcvt.f32.s32.to.zero.pseudo %v633
    %v650 = vcvt.f32.s32.to.zero.pseudo %v634
    %v651 = vcvt.f32.s32.to.zero.pseudo %v635
    %v652 = vcvt.f32.s32.to.zero.pseudo %v636
    %v653 = vcvt.f32.s32.to.zero.pseudo %v637
    %v654 = vcvt.f32.s32.to.zero.pseudo %v638
    %v655 = vcvt.f32.s32.to.zero.pseudo %v639
    %v656 = vcvt.f32.s32.to.zero.pseudo %v640
    %v657 = vcvt.f32.s32.to.zero.pseudo %v641
    %v658 = vsub.s32 %v642, 1
    %v659 = vsub.s32 %v643, 1
    %v660 = vsub.s32 %v644, 1
    %v661 = vsub.s32 %v645, 1
    %v662 = vsub.s32 %v646, 1
    %v663 = vsub.s32 %v647, 1
    %v664 = vsub.s32 %v648, 1
    %v665 = vsub.s32 %v649, 1
    %v666 = vsub.s32 %v650, 1
    %v667 = vsub.s32 %v651, 1
    %v668 = vsub.s32 %v652, 1
    %v669 = vsub.s32 %v653, 1
    %v670 = vsub.s32 %v654, 1
    %v671 = vsub.s32 %v655, 1
    %v672 = vsub.s32 %v656, 1
    %v673 = vsub.s32 %v657, 1
    %vm674 = vcmp.gt.s32.totalorder %v658, 0
    %v675 = vsel %vm674, %v658, 0
    %vm676 = vcmp.gt.s32.totalorder %v659, 0
    %v677 = vsel %vm676, %v659, 0
    %vm678 = vcmp.gt.s32.totalorder %v660, 0
    %v679 = vsel %vm678, %v660, 0
    %vm680 = vcmp.gt.s32.totalorder %v661, 0
    %v681 = vsel %vm680, %v661, 0
    %vm682 = vcmp.gt.s32.totalorder %v662, 0
    %v683 = vsel %vm682, %v662, 0
    %vm684 = vcmp.gt.s32.totalorder %v663, 0
    %v685 = vsel %vm684, %v663, 0
    %vm686 = vcmp.gt.s32.totalorder %v664, 0
    %v687 = vsel %vm686, %v664, 0
    %vm688 = vcmp.gt.s32.totalorder %v665, 0
    %v689 = vsel %vm688, %v665, 0
    %vm690 = vcmp.gt.s32.totalorder %v666, 0
    %v691 = vsel %vm690, %v666, 0
    %vm692 = vcmp.gt.s32.totalorder %v667, 0
    %v693 = vsel %vm692, %v667, 0
    %vm694 = vcmp.gt.s32.totalorder %v668, 0
    %v695 = vsel %vm694, %v668, 0
    %vm696 = vcmp.gt.s32.totalorder %v669, 0
    %v697 = vsel %vm696, %v669, 0
    %vm698 = vcmp.gt.s32.totalorder %v670, 0
    %v699 = vsel %vm698, %v670, 0
    %vm700 = vcmp.gt.s32.totalorder %v671, 0
    %v701 = vsel %vm700, %v671, 0
    %vm702 = vcmp.gt.s32.totalorder %v672, 0
    %v703 = vsel %vm702, %v672, 0
    %vm704 = vcmp.gt.s32.totalorder %v673, 0
    %v705 = vsel %vm704, %v673, 0
    %vm706 = vcmp.lt.s32.totalorder %v675, 14
    %v707 = vsel %vm706, %v675, 14
    %vm708 = vcmp.lt.s32.totalorder %v677, 14
    %v709 = vsel %vm708, %v677, 14
    %vm710 = vcmp.lt.s32.totalorder %v679, 14
    %v711 = vsel %vm710, %v679, 14
    %vm712 = vcmp.lt.s32.totalorder %v681, 14
    %v713 = vsel %vm712, %v681, 14
    %vm714 = vcmp.lt.s32.totalorder %v683, 14
    %v715 = vsel %vm714, %v683, 14
    %vm716 = vcmp.lt.s32.totalorder %v685, 14
    %v717 = vsel %vm716, %v685, 14
    %vm718 = vcmp.lt.s32.totalorder %v687, 14
    %v719 = vsel %vm718, %v687, 14
    %vm720 = vcmp.lt.s32.totalorder %v689, 14
    %v721 = vsel %vm720, %v689, 14
    %vm722 = vcmp.lt.s32.totalorder %v691, 14
    %v723 = vsel %vm722, %v691, 14
    %vm724 = vcmp.lt.s32.totalorder %v693, 14
    %v725 = vsel %vm724, %v693, 14
    %vm726 = vcmp.lt.s32.totalorder %v695, 14
    %v727 = vsel %vm726, %v695, 14
    %vm728 = vcmp.lt.s32.totalorder %v697, 14
    %v729 = vsel %vm728, %v697, 14
    %vm730 = vcmp.lt.s32.totalorder %v699, 14
    %v731 = vsel %vm730, %v699, 14
    %vm732 = vcmp.lt.s32.totalorder %v701, 14
    %v733 = vsel %vm732, %v701, 14
    %vm734 = vcmp.lt.s32.totalorder %v703, 14
    %v735 = vsel %vm734, %v703, 14
    %vm736 = vcmp.lt.s32.totalorder %v705, 14
    %v737 = vsel %vm736, %v705, 14
    %vm738 = vcmp.eq.s32.totalorder %v707, %v14
    %vm739 = vcmp.eq.s32.totalorder %v709, %v14
    %vm740 = vcmp.eq.s32.totalorder %v711, %v14
    %vm741 = vcmp.eq.s32.totalorder %v713, %v14
    %vm742 = vcmp.eq.s32.totalorder %v715, %v14
    %vm743 = vcmp.eq.s32.totalorder %v717, %v14
    %vm744 = vcmp.eq.s32.totalorder %v719, %v14
    %vm745 = vcmp.eq.s32.totalorder %v721, %v14
    %vm746 = vcmp.eq.s32.totalorder %v723, %v14
    %vm747 = vcmp.eq.s32.totalorder %v725, %v14
    %vm748 = vcmp.eq.s32.totalorder %v727, %v14
    %vm749 = vcmp.eq.s32.totalorder %v729, %v14
    %vm750 = vcmp.eq.s32.totalorder %v731, %v14
    %vm751 = vcmp.eq.s32.totalorder %v733, %v14
    %vm752 = vcmp.eq.s32.totalorder %v735, %v14
    %vm753 = vcmp.eq.s32.totalorder %v737, %v14
    %755 = vset.pattern.permute.xlu0 0
    %756 = vperm.xlu0 %755, %v594
    %v757 = vpop.permute.xlu0 %756
    %760 = vset.pattern.permute.xlu0 0
    %761 = vperm.xlu0 %760, %v595
    %v762 = vpop.permute.xlu0 %761
    %765 = vset.pattern.permute.xlu0 0
    %766 = vperm.xlu0 %765, %v596
    %v767 = vpop.permute.xlu0 %766
    %770 = vset.pattern.permute.xlu0 0
    %771 = vperm.xlu0 %770, %v597
    %v772 = vpop.permute.xlu0 %771
    %775 = vset.pattern.permute.xlu0 0
    %776 = vperm.xlu0 %775, %v598
    %v777 = vpop.permute.xlu0 %776
    %780 = vset.pattern.permute.xlu0 0
    %781 = vperm.xlu0 %780, %v599
    %v782 = vpop.permute.xlu0 %781
    %785 = vset.pattern.permute.xlu0 0
    %786 = vperm.xlu0 %785, %v600
    %v787 = vpop.permute.xlu0 %786
    %790 = vset.pattern.permute.xlu0 0
    %791 = vperm.xlu0 %790, %v601
    %v792 = vpop.permute.xlu0 %791
    %795 = vset.pattern.permute.xlu0 0
    %796 = vperm.xlu0 %795, %v602
    %v797 = vpop.permute.xlu0 %796
    %800 = vset.pattern.permute.xlu0 0
    %801 = vperm.xlu0 %800, %v603
    %v802 = vpop.permute.xlu0 %801
    %805 = vset.pattern.permute.xlu0 0
    %806 = vperm.xlu0 %805, %v604
    %v807 = vpop.permute.xlu0 %806
    %810 = vset.pattern.permute.xlu0 0
    %811 = vperm.xlu0 %810, %v605
    %v812 = vpop.permute.xlu0 %811
    %815 = vset.pattern.permute.xlu0 0
    %816 = vperm.xlu0 %815, %v606
    %v817 = vpop.permute.xlu0 %816
    %820 = vset.pattern.permute.xlu0 0
    %821 = vperm.xlu0 %820, %v607
    %v822 = vpop.permute.xlu0 %821
    %825 = vset.pattern.permute.xlu0 0
    %826 = vperm.xlu0 %825, %v608
    %v827 = vpop.permute.xlu0 %826
    %830 = vset.pattern.permute.xlu0 0
    %831 = vperm.xlu0 %830, %v609
    %v832 = vpop.permute.xlu0 %831
    %v834 = vsel %vm738, %v757, 0.0
    %v835 = vsel %vm739, %v762, 0.0
    %v836 = vsel %vm740, %v767, 0.0
    %v837 = vsel %vm741, %v772, 0.0
    %v838 = vsel %vm742, %v777, 0.0
    %v839 = vsel %vm743, %v782, 0.0
    %v840 = vsel %vm744, %v787, 0.0
    %v841 = vsel %vm745, %v792, 0.0
    %v842 = vsel %vm746, %v797, 0.0
    %v843 = vsel %vm747, %v802, 0.0
    %v844 = vsel %vm748, %v807, 0.0
    %v845 = vsel %vm749, %v812, 0.0
    %v846 = vsel %vm750, %v817, 0.0
    %v847 = vsel %vm751, %v822, 0.0
    %v848 = vsel %vm752, %v827, 0.0
    %v849 = vsel %vm753, %v832, 0.0
    %850 = vmatprep.subr.mxu0 0.0
    %851 = vmatpush1.msra.mxu0 %v849
    %852 = vmatprep.subr.mxu0 0.0
    %853 = vmatpush1.msra.mxu0 %v848
    %854 = vmatprep.subr.mxu0 0.0
    %855 = vmatpush1.msra.mxu0 %v847
    %856 = vmatprep.subr.mxu0 0.0
    %857 = vmatpush1.msra.mxu0 %v846
    %858 = vmatprep.subr.mxu0 0.0
    %859 = vmatpush1.msra.mxu0 %v845
    %860 = vmatprep.subr.mxu0 0.0
    %861 = vmatpush1.msra.mxu0 %v844
    %862 = vmatprep.subr.mxu0 0.0
    %863 = vmatpush1.msra.mxu0 %v843
    %864 = vmatprep.subr.mxu0 0.0
    %865 = vmatpush1.msra.mxu0 %v842
    %866 = vmatprep.subr.mxu0 0.0
    %867 = vmatpush1.msra.mxu0 %v841
    %868 = vmatprep.subr.mxu0 0.0
    %869 = vmatpush1.msra.mxu0 %v840
    %870 = vmatprep.subr.mxu0 0.0
    %871 = vmatpush1.msra.mxu0 %v839
    %872 = vmatprep.subr.mxu0 0.0
    %873 = vmatpush1.msra.mxu0 %v838
    %874 = vmatprep.subr.mxu0 0.0
    %875 = vmatpush1.msra.mxu0 %v837
    %876 = vmatprep.subr.mxu0 0.0
    %877 = vmatpush1.msra.mxu0 %v836
    %878 = vmatprep.subr.mxu0 0.0
    %879 = vmatpush1.msra.mxu0 %v835
    %880 = vmatprep.subr.mxu0 0.0
    %881 = vmatpush1.msra.mxu0 %v834
    %882 = vmatprep.subr.mxu0 0.0
    %883 = vmatpush2.msra.mxu0 0.0
    %884 = vmatprep.subr.mxu0 0.0
    %885 = vmatpush2.msra.mxu0 0.0
    %886 = vmatprep.subr.mxu0 0.0
    %887 = vmatpush2.msra.mxu0 0.0
    %888 = vmatprep.subr.mxu0 0.0
    %889 = vmatpush2.msra.mxu0 0.0
    %890 = vmatprep.subr.mxu0 0.0
    %891 = vmatpush2.msra.mxu0 0.0
    %892 = vmatprep.subr.mxu0 0.0
    %893 = vmatpush2.msra.mxu0 0.0
    %894 = vmatprep.subr.mxu0 0.0
    %895 = vmatpush2.msra.mxu0 0.0
    %896 = vmatprep.subr.mxu0 0.0
    %897 = vmatpush2.msra.mxu0 0.0
    %898 = vmatprep.subr.mxu0 0.0
    %899 = vmatpush2.msra.mxu0 0.0
    %900 = vmatprep.subr.mxu0 0.0
    %901 = vmatpush2.msra.mxu0 0.0
    %902 = vmatprep.subr.mxu0 0.0
    %903 = vmatpush2.msra.mxu0 0.0
    %904 = vmatprep.subr.mxu0 0.0
    %905 = vmatpush2.msra.mxu0 0.0
    %906 = vmatprep.subr.mxu0 0.0
    %907 = vmatpush2.msra.mxu0 0.0
    %908 = vmatprep.subr.mxu0 0.0
    %909 = vmatpush2.msra.mxu0 0.0
    %910 = vmatprep.subr.mxu0 0.0
    %911 = vmatpush2.msra.mxu0 0.0
    %912 = vmatprep.subr.mxu0 0.0
    %913 = vmatpush2.msra.mxu0 0.0
    %914 = vmatprep.mubr.f32.mxu0 0.0
    %915 = vmatmul.mubr.f32.gmra.mxu0 1.0
    %v916 = vpop.f32.mrf.mxu0
    %v917 = vadd.f32 0.0, %v916
    %v918 = vpop.f32.mrf.mxu0
    %919 = vdwg.mxu0
    %vm920 = vcmask 114688
    %921 = vst.msk [vmem:[#allocation2] sm:$0x1] %vm920, %v917
    // Predicated region
    $region10: #{tpu_custom_call.1} parent=1 // pred_check
      _
    $region11: #{tpu_custom_call.1} parent=1 // pred_check_branch
      %923 = sbr.rel (0) target = $region13
    $region12: #{tpu_custom_call.1} parent=1 // pred_region
      %s925 = ssub.s32 16, 16
      %926 = vsyncadd [#allocation3], %s925
      %s928 = sshll.u32 [#allocation2], 4
      %s929 = int_to_ptr.vmem [resolvable:$true] %s928
      %931 = dma.vmem_to_hbm [thread:$0]  %s929, 16, %s2, [#allocation3]
    $region13: #{tpu_custom_call.1} parent=1 // pred_fallthru
      _
    // Predicated region
    $region14: #{tpu_custom_call.1} parent=1 // pred_check
      _
    $region15: #{tpu_custom_call.1} parent=1 // pred_check_branch
      %933 = sbr.rel (0) target = $region17
    $region16: #{tpu_custom_call.1} parent=1 // pred_region
      %934 = dma.done [#allocation3], 16
    $region17: #{tpu_custom_call.1} parent=1 // pred_fallthru
      _
    %935 = vsyncpa [#allocation3], 1

</llo_original>
